<compile_context>
chip_gen: v6e
topology: v6e:2x2x1
jax: 0.10.0
libtpu: 0.0.40
codegen_flags: <defaults>
</compile_context>

<pallas_src>
import functools

import jax
import jax.numpy as jnp
from jax.experimental import pallas as pl
from jax.experimental.pallas import tpu as pltpu

HEAD_PAD = 128  # lane-dense fused head / output width (multiple of 128)


def _round_up(n, m):
    return ((n + m - 1) // m) * m


# --------------------------------------------------------------------------
# Kernel: four lane-dense matmuls, f32 accumulation, relu between layers.
# --------------------------------------------------------------------------
def _dueling_kernel(x_ref,
                    w1_ref, b1_ref,
                    w2_ref, b2_ref,
                    wbr_ref, bbr_ref,
                    whd_ref, bhd_ref,
                    out_ref):
    f32 = jnp.float32
    cd = w1_ref.dtype  # MXU operand dtype (f32 or bf16)

    x = x_ref[...].astype(cd)

    # fc1 + relu
    h1 = jnp.dot(x, w1_ref[...], preferred_element_type=f32) + b1_ref[...]
    h1 = jnp.maximum(h1, 0.0)

    # fc2 + relu
    h2 = jnp.dot(h1.astype(cd), w2_ref[...], preferred_element_type=f32) + b2_ref[...]
    h2 = jnp.maximum(h2, 0.0)

    # fused dueling branches: cols [0:D] = value hidden, [D:2D] = adv hidden
    br = jnp.dot(h2.astype(cd), wbr_ref[...], preferred_element_type=f32) + bbr_ref[...]
    br = jnp.maximum(br, 0.0)

    # fused head: mean-centering is folded into the packed weight, so
    # columns [0:action_size] are already Q = V + A - mean(A); the rest are 0.
    q = jnp.dot(br.astype(cd), whd_ref[...], preferred_element_type=f32) + bhd_ref[...]
    out_ref[...] = q.astype(out_ref.dtype)


# --------------------------------------------------------------------------
# Parameter init (PyTorch nn.Linear-style) and fused packing.
# --------------------------------------------------------------------------
def init_params(key, state_size, action_size,
                fc1_units=64, fc2_units=64, dueling_unit=256):
    """Weights stored transposed to (in, out); biases as (1, out)."""
    def linear(k, fan_in, fan_out):
        kw, kb = jax.random.split(k)
        bound = 1.0 / jnp.sqrt(jnp.float32(fan_in))
        w = jax.random.uniform(kw, (fan_in, fan_out), jnp.float32, -bound, bound)
        b = jax.random.uniform(kb, (1, fan_out), jnp.float32, -bound, bound)
        return w, b

    keys = jax.random.split(key, 6)
    fc1_w, fc1_b = linear(keys[0], state_size, fc1_units)
    fc2_w, fc2_b = linear(keys[1], fc1_units, fc2_units)
    fcv_w, fcv_b = linear(keys[2], fc2_units, dueling_unit)
    fca_w, fca_b = linear(keys[3], fc2_units, dueling_unit)
    val_w, val_b = linear(keys[4], dueling_unit, 1)
    adv_w, adv_b = linear(keys[5], dueling_unit, action_size)

    return dict(fc1_w=fc1_w, fc1_b=fc1_b,
                fc2_w=fc2_w, fc2_b=fc2_b,
                fcv_w=fcv_w, fcv_b=fcv_b,
                fca_w=fca_w, fca_b=fca_b,
                val_w=val_w, val_b=val_b,
                adv_w=adv_w, adv_b=adv_b)


def pack_fused_params(p, action_size, compute_dtype=jnp.float32):
    """Pack raw per-layer params into the fused layout the kernel expects.

    Branch fuse : [fcv_w | fca_w] -> (fc2, 2*D), biases concatenated.
    Head fuse   : (2*D, HEAD_PAD) block matrix whose columns [0:A] produce
                  Q directly: rows [0:D] carry val_w broadcast across A cols,
                  rows [D:2D] carry adv_w @ (I_A - 1/A) (mean folded in).
    """
    A = action_size
    D = p["fcv_w"].shape[1]
    f32 = jnp.float32

    wbr = jnp.concatenate([p["fcv_w"], p["fca_w"]], axis=1)          # (fc2, 2D)
    bbr = jnp.concatenate([p["fcv_b"], p["fca_b"]], axis=1)          # (1, 2D)

    center = jnp.eye(A, dtype=f32) - jnp.full((A, A), 1.0 / A, f32)  # I - 1/A
    adv_w_c = p["adv_w"].astype(f32) @ center                        # (D, A)
    adv_b_c = p["adv_b"].astype(f32) @ center                        # (1, A)

    whd = jnp.zeros((2 * D, HEAD_PAD), f32)
    whd = whd.at[:D, :A].set(jnp.broadcast_to(p["val_w"], (D, A)))
    whd = whd.at[D:, :A].set(adv_w_c)

    bhd = jnp.zeros((1, HEAD_PAD), f32)
    bhd = bhd.at[:, :A].set(p["val_b"] + adv_b_c)

    cd = compute_dtype
    return dict(
        w1=p["fc1_w"].astype(cd), b1=p["fc1_b"].astype(f32),
        w2=p["fc2_w"].astype(cd), b2=p["fc2_b"].astype(f32),
        wbr=wbr.astype(cd), bbr=bbr.astype(f32),
        whd=whd.astype(cd), bhd=bhd.astype(f32),
    )


# --------------------------------------------------------------------------
# Wrapper: batch-tiled pallas_call with resident weights.
# --------------------------------------------------------------------------
@functools.partial(jax.jit, static_argnames=("action_size", "tile_b"))
def qnetwork_dueling_forward(x, fused, action_size, tile_b=256):
    """x: (B, state_size) float32. fused: dict from pack_fused_params."""
    B, S = x.shape
    f32 = jnp.float32

    # Tile size: multiple of 8 sublanes; shrink for tiny batches, pad ragged.
    tb = min(tile_b, _round_up(B, 8))
    padded_b = _round_up(B, tb)
    if padded_b != B:
        x = jnp.pad(x, ((0, padded_b - B), (0, 0)))
    grid = (pl.cdiv(padded_b, tb),)

    def full_spec(arr):
        # Whole array as one block, revisited every grid step -> DMA'd once,
        # stays resident in VMEM.
        return pl.BlockSpec(arr.shape, lambda i: (0, 0))

    weights = (fused["w1"], fused["b1"], fused["w2"], fused["b2"],
               fused["wbr"], fused["bbr"], fused["whd"], fused["bhd"])

    in_specs = [pl.BlockSpec((tb, S), lambda i: (i, 0))] + \
               [full_spec(w) for w in weights]
    out_specs = pl.BlockSpec((tb, HEAD_PAD), lambda i: (i, 0))

    flops_per_row = 2 * (S * 64 + 64 * 64 + 64 * 512 + 512 * HEAD_PAD)
    bytes_moved = (x.size + sum(w.size for w in weights)
                   + padded_b * HEAD_PAD) * 4

    out = pl.pallas_call(
        _dueling_kernel,
        out_shape=jax.ShapeDtypeStruct((padded_b, HEAD_PAD), f32),
        grid=grid,
        in_specs=in_specs,
        out_specs=out_specs,
        compiler_params=pltpu.CompilerParams(
            dimension_semantics=("parallel",),        # v7x: shard batch over 2 TCs
            vmem_limit_bytes=32 * 1024 * 1024,
        ),
        cost_estimate=pl.CostEstimate(
            flops=padded_b * flops_per_row,
            transcendentals=0,
            bytes_accessed=bytes_moved),
    )(x, *weights)

    return out[:B, :action_size]


# --------------------------------------------------------------------------
# Pure-JAX reference (mirrors the PyTorch forward exactly).
# --------------------------------------------------------------------------
def reference_forward(x, p):
    h1 = jax.nn.relu(x @ p["fc1_w"] + p["fc1_b"])
    h2 = jax.nn.relu(h1 @ p["fc2_w"] + p["fc2_b"])
    v = jax.nn.relu(h2 @ p["fcv_w"] + p["fcv_b"])
    a = jax.nn.relu(h2 @ p["fca_w"] + p["fca_b"])
    value = v @ p["val_w"] + p["val_b"]
    adv = a @ p["adv_w"] + p["adv_b"]
    return value + adv - jnp.mean(adv, axis=1, keepdims=True)


if __name__ == "__main__":
    state_size = 8
    action_size = 4

    key = jax.random.PRNGKey(0)
    k_params, k_x1, k_x2 = jax.random.split(key, 3)

    params = init_params(k_params, state_size, action_size)
    fused = pack_fused_params(params, action_size, compute_dtype=jnp.float32)

    # Small batch (exercises tile shrink + padding: tb=8, grid=(1,)).
    x_small = jax.random.normal(k_x1, (2, state_size), jnp.float32)
    out_small = jax.block_until_ready(
        qnetwork_dueling_forward(x_small, fused, action_size))
    ref_small = reference_forward(x_small, params)
    assert out_small.shape == (2, action_size), out_small.shape
    assert jnp.allclose(out_small, ref_small, atol=1e-4, rtol=1e-4)

    # Larger ragged batch (exercises grid > 1 with padded last tile).
    x_big = jax.random.normal(k_x2, (300, state_size), jnp.float32)
    out_big = jax.block_until_ready(
        qnetwork_dueling_forward(x_big, fused, action_size, tile_b=256))
    ref_big = reference_forward(x_big, params)
    assert out_big.shape == (300, action_size), out_big.shape
    assert jnp.allclose(out_big, ref_big, atol=1e-4, rtol=1e-4)

    # TODO(synk): on v6e/v7x, pass compute_dtype=jnp.bfloat16 to pack_fused_params
    # for bf16 MXU operands with f32 accumulation (loosen tolerance to ~1e-2).

    print("KERNEL_OK")
</pallas_src>

<mosaic_0001>
module attributes {stable_mosaic.version = 11 : i64} {
  func.func @_dueling_kernel(%arg0: i32, %arg1: memref<8x8xf32, #tpu.memory_space<vmem>>, %arg2: memref<8x64xf32, #tpu.memory_space<vmem>>, %arg3: memref<1x64xf32, #tpu.memory_space<vmem>>, %arg4: memref<64x64xf32, #tpu.memory_space<vmem>>, %arg5: memref<1x64xf32, #tpu.memory_space<vmem>>, %arg6: memref<64x512xf32, #tpu.memory_space<vmem>>, %arg7: memref<1x512xf32, #tpu.memory_space<vmem>>, %arg8: memref<512x128xf32, #tpu.memory_space<vmem>>, %arg9: memref<1x128xf32, #tpu.memory_space<vmem>>, %arg10: memref<8x128xf32, #tpu.memory_space<vmem>>) attributes {dimension_semantics = [#tpu.dimension_semantics<parallel>], iteration_bounds = array<i64: 1>, scalar_prefetch = 0 : i64, scratch_operands = 0 : i64, tpu.core_type = #tpu.core_type<tc>, window_params = [{transform_indices = @transform_0, window_bounds = array<i64: 8, 8>}, {pipeline_mode = #tpu.pipeline_mode<synchronous>, transform_indices = @transform_1, window_bounds = array<i64: 8, 64>}, {pipeline_mode = #tpu.pipeline_mode<synchronous>, transform_indices = @transform_2, window_bounds = array<i64: 1, 64>}, {pipeline_mode = #tpu.pipeline_mode<synchronous>, transform_indices = @transform_3, window_bounds = array<i64: 64, 64>}, {pipeline_mode = #tpu.pipeline_mode<synchronous>, transform_indices = @transform_4, window_bounds = array<i64: 1, 64>}, {pipeline_mode = #tpu.pipeline_mode<synchronous>, transform_indices = @transform_5, window_bounds = array<i64: 64, 512>}, {pipeline_mode = #tpu.pipeline_mode<synchronous>, transform_indices = @transform_6, window_bounds = array<i64: 1, 512>}, {pipeline_mode = #tpu.pipeline_mode<synchronous>, transform_indices = @transform_7, window_bounds = array<i64: 512, 128>}, {pipeline_mode = #tpu.pipeline_mode<synchronous>, transform_indices = @transform_8, window_bounds = array<i64: 1, 128>}, {transform_indices = @transform_9, window_bounds = array<i64: 8, 128>}]} {
    %c0 = arith.constant 0 : index
    %c0_0 = arith.constant 0 : index
    %0 = vector.load %arg1[%c0, %c0_0] : memref<8x8xf32, #tpu.memory_space<vmem>>, vector<8x8xf32>
    %c0_1 = arith.constant 0 : index
    %c0_2 = arith.constant 0 : index
    %1 = vector.load %arg2[%c0_1, %c0_2] : memref<8x64xf32, #tpu.memory_space<vmem>>, vector<8x64xf32>
    %cst = arith.constant dense<0.000000e+00> : vector<8x64xf32>
    %2 = tpu.matmul %0, %1, %cst {dimension_numbers = #tpu.dot_dimension_numbers<[1], [0], [0], [1], [0, 0, 1, 1], [], []>} : vector<8x8xf32>, vector<8x64xf32>, vector<8x64xf32> -> vector<8x64xf32>
    %c0_3 = arith.constant 0 : index
    %c0_4 = arith.constant 0 : index
    %3 = vector.load %arg3[%c0_3, %c0_4] : memref<1x64xf32, #tpu.memory_space<vmem>>, vector<1x64xf32>
    %4 = vector.broadcast %3 : vector<1x64xf32> to vector<8x64xf32>
    %5 = arith.addf %2, %4 : vector<8x64xf32>
    %cst_5 = arith.constant 0.000000e+00 : f32
    %6 = vector.broadcast %cst_5 : f32 to vector<8x64xf32>
    %7 = arith.maximumf %5, %6 : vector<8x64xf32>
    %c0_6 = arith.constant 0 : index
    %c0_7 = arith.constant 0 : index
    %8 = vector.load %arg4[%c0_6, %c0_7] : memref<64x64xf32, #tpu.memory_space<vmem>>, vector<64x64xf32>
    %cst_8 = arith.constant dense<0.000000e+00> : vector<8x64xf32>
    %9 = tpu.matmul %7, %8, %cst_8 {dimension_numbers = #tpu.dot_dimension_numbers<[1], [0], [0], [1], [0, 0, 1, 1], [], []>} : vector<8x64xf32>, vector<64x64xf32>, vector<8x64xf32> -> vector<8x64xf32>
    %c0_9 = arith.constant 0 : index
    %c0_10 = arith.constant 0 : index
    %10 = vector.load %arg5[%c0_9, %c0_10] : memref<1x64xf32, #tpu.memory_space<vmem>>, vector<1x64xf32>
    %11 = vector.broadcast %10 : vector<1x64xf32> to vector<8x64xf32>
    %12 = arith.addf %9, %11 : vector<8x64xf32>
    %cst_11 = arith.constant 0.000000e+00 : f32
    %13 = vector.broadcast %cst_11 : f32 to vector<8x64xf32>
    %14 = arith.maximumf %12, %13 : vector<8x64xf32>
    %c0_12 = arith.constant 0 : index
    %c0_13 = arith.constant 0 : index
    %15 = vector.load %arg6[%c0_12, %c0_13] : memref<64x512xf32, #tpu.memory_space<vmem>>, vector<64x512xf32>
    %cst_14 = arith.constant dense<0.000000e+00> : vector<8x512xf32>
    %16 = tpu.matmul %14, %15, %cst_14 {dimension_numbers = #tpu.dot_dimension_numbers<[1], [0], [0], [1], [0, 0, 1, 1], [], []>} : vector<8x64xf32>, vector<64x512xf32>, vector<8x512xf32> -> vector<8x512xf32>
    %c0_15 = arith.constant 0 : index
    %c0_16 = arith.constant 0 : index
    %17 = vector.load %arg7[%c0_15, %c0_16] : memref<1x512xf32, #tpu.memory_space<vmem>>, vector<1x512xf32>
    %18 = vector.broadcast %17 : vector<1x512xf32> to vector<8x512xf32>
    %19 = arith.addf %16, %18 : vector<8x512xf32>
    %cst_17 = arith.constant 0.000000e+00 : f32
    %20 = vector.broadcast %cst_17 : f32 to vector<8x512xf32>
    %21 = arith.maximumf %19, %20 : vector<8x512xf32>
    %c0_18 = arith.constant 0 : index
    %c0_19 = arith.constant 0 : index
    %22 = vector.load %arg8[%c0_18, %c0_19] : memref<512x128xf32, #tpu.memory_space<vmem>>, vector<512x128xf32>
    %cst_20 = arith.constant dense<0.000000e+00> : vector<8x128xf32>
    %23 = tpu.matmul %21, %22, %cst_20 {dimension_numbers = #tpu.dot_dimension_numbers<[1], [0], [0], [1], [0, 0, 1, 1], [], []>} : vector<8x512xf32>, vector<512x128xf32>, vector<8x128xf32> -> vector<8x128xf32>
    %c0_21 = arith.constant 0 : index
    %c0_22 = arith.constant 0 : index
    %24 = vector.load %arg9[%c0_21, %c0_22] : memref<1x128xf32, #tpu.memory_space<vmem>>, vector<1x128xf32>
    %25 = vector.broadcast %24 : vector<1x128xf32> to vector<8x128xf32>
    %26 = arith.addf %23, %25 : vector<8x128xf32>
    %c0_23 = arith.constant 0 : index
    %c0_24 = arith.constant 0 : index
    %27 = vector.load %arg10[%c0_23, %c0_24] : memref<8x128xf32, #tpu.memory_space<vmem>>, vector<8x128xf32>
    tpu.vector_store %arg10[%c0_23, %c0_24], %26 {strides = array<i32>} : memref<8x128xf32, #tpu.memory_space<vmem>>, vector<8x128xf32>,
    return
  }
  func.func @transform_0(%arg0: i32) -> (i32, i32) {
    %c0_i32 = arith.constant 0 : i32
    %c0_i32_0 = arith.constant 0 : i32
    return %arg0, %c0_i32 : i32, i32
  }
  func.func @transform_1(%arg0: i32) -> (i32, i32) {
    %c0_i32 = arith.constant 0 : i32
    %c0_i32_0 = arith.constant 0 : i32
    %c0_i32_1 = arith.constant 0 : i32
    return %c0_i32, %c0_i32_0 : i32, i32
  }
  func.func @transform_2(%arg0: i32) -> (i32, i32) {
    %c0_i32 = arith.constant 0 : i32
    %c0_i32_0 = arith.constant 0 : i32
    %c0_i32_1 = arith.constant 0 : i32
    return %c0_i32, %c0_i32_0 : i32, i32
  }
  func.func @transform_3(%arg0: i32) -> (i32, i32) {
    %c0_i32 = arith.constant 0 : i32
    %c0_i32_0 = arith.constant 0 : i32
    %c0_i32_1 = arith.constant 0 : i32
    return %c0_i32, %c0_i32_0 : i32, i32
  }
  func.func @transform_4(%arg0: i32) -> (i32, i32) {
    %c0_i32 = arith.constant 0 : i32
    %c0_i32_0 = arith.constant 0 : i32
    %c0_i32_1 = arith.constant 0 : i32
    return %c0_i32, %c0_i32_0 : i32, i32
  }
  func.func @transform_5(%arg0: i32) -> (i32, i32) {
    %c0_i32 = arith.constant 0 : i32
    %c0_i32_0 = arith.constant 0 : i32
    %c0_i32_1 = arith.constant 0 : i32
    return %c0_i32, %c0_i32_0 : i32, i32
  }
  func.func @transform_6(%arg0: i32) -> (i32, i32) {
    %c0_i32 = arith.constant 0 : i32
    %c0_i32_0 = arith.constant 0 : i32
    %c0_i32_1 = arith.constant 0 : i32
    return %c0_i32, %c0_i32_0 : i32, i32
  }
  func.func @transform_7(%arg0: i32) -> (i32, i32) {
    %c0_i32 = arith.constant 0 : i32
    %c0_i32_0 = arith.constant 0 : i32
    %c0_i32_1 = arith.constant 0 : i32
    return %c0_i32, %c0_i32_0 : i32, i32
  }
  func.func @transform_8(%arg0: i32) -> (i32, i32) {
    %c0_i32 = arith.constant 0 : i32
    %c0_i32_0 = arith.constant 0 : i32
    %c0_i32_1 = arith.constant 0 : i32
    return %c0_i32, %c0_i32_0 : i32, i32
  }
  func.func @transform_9(%arg0: i32) -> (i32, i32) {
    %c0_i32 = arith.constant 0 : i32
    %c0_i32_0 = arith.constant 0 : i32
    return %arg0, %c0_i32 : i32, i32
  }
}

</mosaic_0001>

<llo_original>
// kernel: qnetwork_dueling_forward.1
$region0: #{qnetwork_dueling_forward.1}
  #allocation0 [shape = 'u32[]', space=smem, size = 0x4, offset = 0x4, fixed_abs, tag = 'smem constant byte address 0x4 - core index']
  #allocation1 [shape = 'u32[144,128]{1,0:T(1,128)}', space=vmem, size = 0x12000, scoped, tag = 'internal scratch']
  %s0 = inlined_call_operand.vmem [shape: f32[8,8], index: 0, kind: input, shape index: {}]
  %s1 = inlined_call_operand.vmem [shape: f32[8,64], index: 1, kind: input, shape index: {}]
  %s2 = inlined_call_operand.vmem [shape: f32[1,64], index: 2, kind: input, shape index: {}]
  %s3 = inlined_call_operand.hbm [shape: f32[64,64], index: 3, kind: input, shape index: {}]
  %s4 = inlined_call_operand.vmem [shape: f32[1,64], index: 4, kind: input, shape index: {}]
  %s5 = inlined_call_operand.hbm [shape: f32[64,512], index: 5, kind: input, shape index: {}]
  %s6 = inlined_call_operand.vmem [shape: f32[1,512], index: 6, kind: input, shape index: {}]
  %s7 = inlined_call_operand.hbm [shape: f32[512,128], index: 7, kind: input, shape index: {}]
  %s8 = inlined_call_operand.vmem [shape: f32[1,128], index: 8, kind: input, shape index: {}]
  %s9 = inlined_call_operand.vmem [shape: f32[8,128], index: 9, kind: output, shape index: {}]
  %s10 = sld [smem:[#allocation0]]
  $region58: #{qnetwork_dueling_forward.1} parent=0
    _
  %s12 = ssub.s32 1, %s10
  %s13 = scalar_select 0, %s12, %s10
  $region1: #{qnetwork_dueling_forward.1} parent=0
    #allocation2 [shape = 'u8[32768]{0}', space=vmem, size = 0x8000, scoped, tag = 'input window, operand 3, single buffered']
    #allocation3 [shape = 's32[1]{0}', space=sflag, size = 0x4, scoped, tag = 'scoped memory for qnetwork_dueling_forward.1']
    #allocation4 [shape = 'u8[131072]{0}', space=vmem, size = 0x20000, scoped, tag = 'input window, operand 5, single buffered']
    #allocation5 [shape = 's32[1]{0}', space=sflag, size = 0x4, scoped, tag = 'scoped memory for qnetwork_dueling_forward.1']
    #allocation6 [shape = 'u8[262144]{0}', space=vmem, size = 0x40000, scoped, tag = 'input window, operand 7, single buffered']
    %14 = vsyncpa [#allocation3], 0
    %15 = vsyncpa [#allocation5], 0
    // Predicated region
    $region2: #{qnetwork_dueling_forward.1} parent=1 // pred_check
      _
    $region3: #{qnetwork_dueling_forward.1} parent=1 // pred_check_branch
      %17 = sbr.rel (0) target = $region5
    $region4: #{qnetwork_dueling_forward.1} parent=1 // pred_region
      _
    $region5: #{qnetwork_dueling_forward.1} parent=1 // pred_fallthru
      _
    // Predicated region
    $region6: #{qnetwork_dueling_forward.1} parent=1 // pred_check
      _
    $region7: #{qnetwork_dueling_forward.1} parent=1 // pred_check_branch
      %19 = sbr.rel (0) target = $region9
    $region8: #{qnetwork_dueling_forward.1} parent=1 // pred_region
      _
    $region9: #{qnetwork_dueling_forward.1} parent=1 // pred_fallthru
      _
    // Predicated region
    $region10: #{qnetwork_dueling_forward.1} parent=1 // pred_check
      _
    $region11: #{qnetwork_dueling_forward.1} parent=1 // pred_check_branch
      %21 = sbr.rel (0) target = $region13
    $region12: #{qnetwork_dueling_forward.1} parent=1 // pred_region
      _
    $region13: #{qnetwork_dueling_forward.1} parent=1 // pred_fallthru
      _
    // Predicated region
    $region14: #{qnetwork_dueling_forward.1} parent=1 // pred_check
      _
    $region15: #{qnetwork_dueling_forward.1} parent=1 // pred_check_branch
      %23 = sbr.rel (0) target = $region17
    $region16: #{qnetwork_dueling_forward.1} parent=1 // pred_region
      %s25 = ssub.s32 1024, 1024
      %26 = vsyncadd [#allocation3], %s25
      %s27 = sshll.u32 [#allocation2], 4
      %s28 = int_to_ptr.vmem [resolvable:$true] %s27
      %33 = dma.hbm_to_vmem [thread:$0]  %s3, 1024, %s28, [#allocation3], 128, 128, 8
    $region17: #{qnetwork_dueling_forward.1} parent=1 // pred_fallthru
      _
    // Predicated region
    $region18: #{qnetwork_dueling_forward.1} parent=1 // pred_check
      _
    $region19: #{qnetwork_dueling_forward.1} parent=1 // pred_check_branch
      %35 = sbr.rel (0) target = $region21
    $region20: #{qnetwork_dueling_forward.1} parent=1 // pred_region
      _
    $region21: #{qnetwork_dueling_forward.1} parent=1 // pred_fallthru
      _
    // Predicated region
    $region22: #{qnetwork_dueling_forward.1} parent=1 // pred_check
      _
    $region23: #{qnetwork_dueling_forward.1} parent=1 // pred_check_branch
      %37 = sbr.rel (0) target = $region25
    $region24: #{qnetwork_dueling_forward.1} parent=1 // pred_region
      %s39 = ssub.s32 4096, 4096
      %40 = vsyncadd [#allocation5], %s39
      %s41 = sshll.u32 [#allocation4], 4
      %s42 = int_to_ptr.vmem [resolvable:$true] %s41
      %47 = dma.hbm_to_vmem [thread:$0]  %s5, 4096, %s42, [#allocation5], 512, 512, 32
    $region25: #{qnetwork_dueling_forward.1} parent=1 // pred_fallthru
      _
    // Predicated region
    $region26: #{qnetwork_dueling_forward.1} parent=1 // pred_check
      _
    $region27: #{qnetwork_dueling_forward.1} parent=1 // pred_check_branch
      %49 = sbr.rel (0) target = $region29
    $region28: #{qnetwork_dueling_forward.1} parent=1 // pred_region
      _
    $region29: #{qnetwork_dueling_forward.1} parent=1 // pred_fallthru
      _
    // Predicated region
    $region30: #{qnetwork_dueling_forward.1} parent=1 // pred_check
      _
    $region31: #{qnetwork_dueling_forward.1} parent=1 // pred_check_branch
      %51 = sbr.rel (0) target = $region33
    $region32: #{qnetwork_dueling_forward.1} parent=1 // pred_region
      %s53 = ssub.s32 8192, 8192
      %54 = vsyncadd [#allocation5], %s53
      %s55 = sshll.u32 [#allocation6], 4
      %s56 = int_to_ptr.vmem [resolvable:$true] %s55
      %61 = dma.hbm_to_vmem [thread:$0]  %s7, 8192, %s56, [#allocation5], 128, 128, 8
    $region33: #{qnetwork_dueling_forward.1} parent=1 // pred_fallthru
      _
    // Predicated region
    $region34: #{qnetwork_dueling_forward.1} parent=1 // pred_check
      _
    $region35: #{qnetwork_dueling_forward.1} parent=1 // pred_check_branch
      %63 = sbr.rel (0) target = $region37
    $region36: #{qnetwork_dueling_forward.1} parent=1 // pred_region
      _
    $region37: #{qnetwork_dueling_forward.1} parent=1 // pred_fallthru
      _
    // Predicated region
    $region38: #{qnetwork_dueling_forward.1} parent=1 // pred_check
      _
    $region39: #{qnetwork_dueling_forward.1} parent=1 // pred_check_branch
      %65 = sbr.rel (0) target = $region41
    $region40: #{qnetwork_dueling_forward.1} parent=1 // pred_region
      %66 = dma.done [#allocation3], 1024
    $region41: #{qnetwork_dueling_forward.1} parent=1 // pred_fallthru
      _
    // Predicated region
    $region42: #{qnetwork_dueling_forward.1} parent=1 // pred_check
      _
    $region43: #{qnetwork_dueling_forward.1} parent=1 // pred_check_branch
      %68 = sbr.rel (0) target = $region45
    $region44: #{qnetwork_dueling_forward.1} parent=1 // pred_region
      %69 = dma.done [#allocation5], 4096
    $region45: #{qnetwork_dueling_forward.1} parent=1 // pred_fallthru
      _
    // Predicated region
    $region46: #{qnetwork_dueling_forward.1} parent=1 // pred_check
      _
    $region47: #{qnetwork_dueling_forward.1} parent=1 // pred_check_branch
      %71 = sbr.rel (0) target = $region49
    $region48: #{qnetwork_dueling_forward.1} parent=1 // pred_region
      %72 = dma.done [#allocation5], 8192
    $region49: #{qnetwork_dueling_forward.1} parent=1 // pred_fallthru
      _
    %v73 = vld [vmem:[%s0] sm:$0xff]
    %v74 = vld [vmem:[%s1] sm:$0xff]
    %v75 = vld [vmem:[%s2] sm:$0x1]
    %v77 = vlaneseq
    %v78 = vshrl.u32 %v77, 7
    %v79 = vsub.s32 0, %v78
    %v80 = vrot.slane %v75, %v79
    %vm82 = vcmask 64512
    %v84 = vsel %vm82, %v73, 0
    %86 = vmatprep.subr.mxu0 0.0
    %87 = vmatpush1.msra.mxu0 0.0
    %88 = vmatprep.subr.mxu0 0.0
    %89 = vmatpush1.msra.mxu0 0.0
    %90 = vmatprep.subr.mxu0 0.0
    %91 = vmatpush1.msra.mxu0 0.0
    %92 = vmatprep.subr.mxu0 0.0
    %93 = vmatpush1.msra.mxu0 0.0
    %94 = vmatprep.subr.mxu0 0.0
    %95 = vmatpush1.msra.mxu0 0.0
    %96 = vmatprep.subr.mxu0 0.0
    %97 = vmatpush1.msra.mxu0 0.0
    %98 = vmatprep.subr.mxu0 0.0
    %99 = vmatpush1.msra.mxu0 0.0
    %100 = vmatprep.subr.mxu0 0.0
    %101 = vmatpush1.msra.mxu0 0.0
    %102 = vmatprep.subr.mxu0 0.0
    %103 = vmatpush1.msra.mxu0 0.0
    %104 = vmatprep.subr.mxu0 0.0
    %105 = vmatpush1.msra.mxu0 0.0
    %106 = vmatprep.subr.mxu0 0.0
    %107 = vmatpush1.msra.mxu0 0.0
    %108 = vmatprep.subr.mxu0 0.0
    %109 = vmatpush1.msra.mxu0 0.0
    %110 = vmatprep.subr.mxu0 0.0
    %111 = vmatpush1.msra.mxu0 0.0
    %112 = vmatprep.subr.mxu0 0.0
    %113 = vmatpush1.msra.mxu0 0.0
    %114 = vmatprep.subr.mxu0 0.0
    %115 = vmatpush1.msra.mxu0 0.0
    %116 = vmatprep.subr.mxu0 0.0
    %117 = vmatpush1.msra.mxu0 %v74
    %118 = vmatprep.subr.mxu0 0.0
    %119 = vmatpush2.msra.mxu0 0.0
    %120 = vmatprep.subr.mxu0 0.0
    %121 = vmatpush2.msra.mxu0 0.0
    %122 = vmatprep.subr.mxu0 0.0
    %123 = vmatpush2.msra.mxu0 0.0
    %124 = vmatprep.subr.mxu0 0.0
    %125 = vmatpush2.msra.mxu0 0.0
    %126 = vmatprep.subr.mxu0 0.0
    %127 = vmatpush2.msra.mxu0 0.0
    %128 = vmatprep.subr.mxu0 0.0
    %129 = vmatpush2.msra.mxu0 0.0
    %130 = vmatprep.subr.mxu0 0.0
    %131 = vmatpush2.msra.mxu0 0.0
    %132 = vmatprep.subr.mxu0 0.0
    %133 = vmatpush2.msra.mxu0 0.0
    %134 = vmatprep.subr.mxu0 0.0
    %135 = vmatpush2.msra.mxu0 0.0
    %136 = vmatprep.subr.mxu0 0.0
    %137 = vmatpush2.msra.mxu0 0.0
    %138 = vmatprep.subr.mxu0 0.0
    %139 = vmatpush2.msra.mxu0 0.0
    %140 = vmatprep.subr.mxu0 0.0
    %141 = vmatpush2.msra.mxu0 0.0
    %142 = vmatprep.subr.mxu0 0.0
    %143 = vmatpush2.msra.mxu0 0.0
    %144 = vmatprep.subr.mxu0 0.0
    %145 = vmatpush2.msra.mxu0 0.0
    %146 = vmatprep.subr.mxu0 0.0
    %147 = vmatpush2.msra.mxu0 0.0
    %148 = vmatprep.subr.mxu0 0.0
    %149 = vmatpush2.msra.mxu0 0.0
    %150 = vmatprep.mubr.f32.mxu0 0.0
    %151 = vmatmul.mubr.f32.gmra.mxu0 %v84
    %v152 = vpop.f32.mrf.mxu0
    %v153 = vadd.f32 %v80, %v152
    %v154 = vpop.f32.mrf.mxu0
    %155 = vdwg.mxu0
    %v156 = vmax.f32 %v153, 0.0
    %v157 = vld [vmem:[#allocation2] sm:$0xff]
    %v158 = vld [vmem:[#allocation2 + $0x8] sm:$0xff]
    %v159 = vld [vmem:[#allocation2 + $0x10] sm:$0xff]
    %v160 = vld [vmem:[#allocation2 + $0x18] sm:$0xff]
    %v161 = vld [vmem:[#allocation2 + $0x20] sm:$0xff]
    %v162 = vld [vmem:[#allocation2 + $0x28] sm:$0xff]
    %v163 = vld [vmem:[#allocation2 + $0x30] sm:$0xff]
    %v164 = vld [vmem:[#allocation2 + $0x38] sm:$0xff]
    %v165 = vld [vmem:[%s4] sm:$0x1]
    %v167 = vlaneseq
    %v168 = vshrl.u32 %v167, 7
    %v169 = vsub.s32 0, %v168
    %v170 = vrot.slane %v165, %v169
    %vm172 = vcmask 523264
    %v174 = vsel %vm172, %v156, 0
    %176 = vmatprep.subr.mxu0 0.0
    %177 = vmatpush1.msra.mxu0 0.0
    %178 = vmatprep.subr.mxu0 0.0
    %179 = vmatpush1.msra.mxu0 0.0
    %180 = vmatprep.subr.mxu0 0.0
    %181 = vmatpush1.msra.mxu0 0.0
    %182 = vmatprep.subr.mxu0 0.0
    %183 = vmatpush1.msra.mxu0 0.0
    %184 = vmatprep.subr.mxu0 0.0
    %185 = vmatpush1.msra.mxu0 0.0
    %186 = vmatprep.subr.mxu0 0.0
    %187 = vmatpush1.msra.mxu0 0.0
    %188 = vmatprep.subr.mxu0 0.0
    %189 = vmatpush1.msra.mxu0 0.0
    %190 = vmatprep.subr.mxu0 0.0
    %191 = vmatpush1.msra.mxu0 0.0
    %192 = vmatprep.subr.mxu0 0.0
    %193 = vmatpush1.msra.mxu0 %v164
    %194 = vmatprep.subr.mxu0 0.0
    %195 = vmatpush1.msra.mxu0 %v163
    %196 = vmatprep.subr.mxu0 0.0
    %197 = vmatpush1.msra.mxu0 %v162
    %198 = vmatprep.subr.mxu0 0.0
    %199 = vmatpush1.msra.mxu0 %v161
    %200 = vmatprep.subr.mxu0 0.0
    %201 = vmatpush1.msra.mxu0 %v160
    %202 = vmatprep.subr.mxu0 0.0
    %203 = vmatpush1.msra.mxu0 %v159
    %204 = vmatprep.subr.mxu0 0.0
    %205 = vmatpush1.msra.mxu0 %v158
    %206 = vmatprep.subr.mxu0 0.0
    %207 = vmatpush1.msra.mxu0 %v157
    %208 = vmatprep.subr.mxu0 0.0
    %209 = vmatpush2.msra.mxu0 0.0
    %210 = vmatprep.subr.mxu0 0.0
    %211 = vmatpush2.msra.mxu0 0.0
    %212 = vmatprep.subr.mxu0 0.0
    %213 = vmatpush2.msra.mxu0 0.0
    %214 = vmatprep.subr.mxu0 0.0
    %215 = vmatpush2.msra.mxu0 0.0
    %216 = vmatprep.subr.mxu0 0.0
    %217 = vmatpush2.msra.mxu0 0.0
    %218 = vmatprep.subr.mxu0 0.0
    %219 = vmatpush2.msra.mxu0 0.0
    %220 = vmatprep.subr.mxu0 0.0
    %221 = vmatpush2.msra.mxu0 0.0
    %222 = vmatprep.subr.mxu0 0.0
    %223 = vmatpush2.msra.mxu0 0.0
    %224 = vmatprep.subr.mxu0 0.0
    %225 = vmatpush2.msra.mxu0 0.0
    %226 = vmatprep.subr.mxu0 0.0
    %227 = vmatpush2.msra.mxu0 0.0
    %228 = vmatprep.subr.mxu0 0.0
    %229 = vmatpush2.msra.mxu0 0.0
    %230 = vmatprep.subr.mxu0 0.0
    %231 = vmatpush2.msra.mxu0 0.0
    %232 = vmatprep.subr.mxu0 0.0
    %233 = vmatpush2.msra.mxu0 0.0
    %234 = vmatprep.subr.mxu0 0.0
    %235 = vmatpush2.msra.mxu0 0.0
    %236 = vmatprep.subr.mxu0 0.0
    %237 = vmatpush2.msra.mxu0 0.0
    %238 = vmatprep.subr.mxu0 0.0
    %239 = vmatpush2.msra.mxu0 0.0
    %240 = vmatprep.mubr.f32.mxu0 0.0
    %241 = vmatmul.mubr.f32.gmra.mxu0 %v174
    %v242 = vpop.f32.mrf.mxu0
    %v243 = vadd.f32 %v170, %v242
    %v244 = vpop.f32.mrf.mxu0
    %245 = vdwg.mxu0
    %v246 = vmax.f32 %v243, 0.0
    %v247 = vld [vmem:[#allocation4] sm:$0xff]
    %v248 = vld [vmem:[#allocation4 + $0x8] sm:$0xff]
    %v249 = vld [vmem:[#allocation4 + $0x10] sm:$0xff]
    %v250 = vld [vmem:[#allocation4 + $0x18] sm:$0xff]
    %v251 = vld [vmem:[#allocation4 + $0x20] sm:$0xff]
    %v252 = vld [vmem:[#allocation4 + $0x28] sm:$0xff]
    %v253 = vld [vmem:[#allocation4 + $0x30] sm:$0xff]
    %v254 = vld [vmem:[#allocation4 + $0x38] sm:$0xff]
    %v255 = vld [vmem:[#allocation4 + $0x40] sm:$0xff]
    %v256 = vld [vmem:[#allocation4 + $0x48] sm:$0xff]
    %v257 = vld [vmem:[#allocation4 + $0x50] sm:$0xff]
    %v258 = vld [vmem:[#allocation4 + $0x58] sm:$0xff]
    %v259 = vld [vmem:[#allocation4 + $0x60] sm:$0xff]
    %v260 = vld [vmem:[#allocation4 + $0x68] sm:$0xff]
    %v261 = vld [vmem:[#allocation4 + $0x70] sm:$0xff]
    %v262 = vld [vmem:[#allocation4 + $0x78] sm:$0xff]
    %v263 = vld [vmem:[#allocation4 + $0x80] sm:$0xff]
    %v264 = vld [vmem:[#allocation4 + $0x88] sm:$0xff]
    %v265 = vld [vmem:[#allocation4 + $0x90] sm:$0xff]
    %v266 = vld [vmem:[#allocation4 + $0x98] sm:$0xff]
    %v267 = vld [vmem:[#allocation4 + $0xa0] sm:$0xff]
    %v268 = vld [vmem:[#allocation4 + $0xa8] sm:$0xff]
    %v269 = vld [vmem:[#allocation4 + $0xb0] sm:$0xff]
    %v270 = vld [vmem:[#allocation4 + $0xb8] sm:$0xff]
    %v271 = vld [vmem:[#allocation4 + $0xc0] sm:$0xff]
    %v272 = vld [vmem:[#allocation4 + $0xc8] sm:$0xff]
    %v273 = vld [vmem:[#allocation4 + $0xd0] sm:$0xff]
    %v274 = vld [vmem:[#allocation4 + $0xd8] sm:$0xff]
    %v275 = vld [vmem:[#allocation4 + $0xe0] sm:$0xff]
    %v276 = vld [vmem:[#allocation4 + $0xe8] sm:$0xff]
    %v277 = vld [vmem:[#allocation4 + $0xf0] sm:$0xff]
    %v278 = vld [vmem:[#allocation4 + $0xf8] sm:$0xff]
    %v279 = vld [vmem:[%s6] sm:$0xf]
    %v281 = vlaneseq
    %v282 = vshrl.u32 %v281, 7
    %v283 = vsub.s32 0, %v282
    %v284 = vrot.slane %v279, %v283
    %v285 = vlaneseq
    %v286 = vshrl.u32 %v285, 7
    %v287 = vsub.s32 1, %v286
    %v288 = vrot.slane %v279, %v287
    %v289 = vlaneseq
    %v290 = vshrl.u32 %v289, 7
    %v291 = vsub.s32 2, %v290
    %v292 = vrot.slane %v279, %v291
    %v293 = vlaneseq
    %v294 = vshrl.u32 %v293, 7
    %v295 = vsub.s32 3, %v294
    %v296 = vrot.slane %v279, %v295
    %v302 = vsel %vm172, %v246, 0
    %304 = vmatprep.subr.mxu0 0.0
    %305 = vmatpush1.msra.mxu0 0.0
    %306 = vmatprep.subr.mxu0 0.0
    %307 = vmatpush1.msra.mxu0 0.0
    %308 = vmatprep.subr.mxu0 0.0
    %309 = vmatpush1.msra.mxu0 0.0
    %310 = vmatprep.subr.mxu0 0.0
    %311 = vmatpush1.msra.mxu0 0.0
    %312 = vmatprep.subr.mxu0 0.0
    %313 = vmatpush1.msra.mxu0 0.0
    %314 = vmatprep.subr.mxu0 0.0
    %315 = vmatpush1.msra.mxu0 0.0
    %316 = vmatprep.subr.mxu0 0.0
    %317 = vmatpush1.msra.mxu0 0.0
    %318 = vmatprep.subr.mxu0 0.0
    %319 = vmatpush1.msra.mxu0 0.0
    %320 = vmatprep.subr.mxu0 %v276
    %321 = vmatpush1.msra.mxu0 %v275
    %322 = vmatprep.subr.mxu0 %v272
    %323 = vmatpush1.msra.mxu0 %v271
    %324 = vmatprep.subr.mxu0 %v268
    %325 = vmatpush1.msra.mxu0 %v267
    %326 = vmatprep.subr.mxu0 %v264
    %327 = vmatpush1.msra.mxu0 %v263
    %328 = vmatprep.subr.mxu0 %v260
    %329 = vmatpush1.msra.mxu0 %v259
    %330 = vmatprep.subr.mxu0 %v256
    %331 = vmatpush1.msra.mxu0 %v255
    %332 = vmatprep.subr.mxu0 %v252
    %333 = vmatpush1.msra.mxu0 %v251
    %334 = vmatprep.subr.mxu0 %v248
    %335 = vmatpush1.msra.mxu0 %v247
    %336 = vmatprep.subr.mxu0 0.0
    %337 = vmatpush2.msra.mxu0 0.0
    %338 = vmatprep.subr.mxu0 0.0
    %339 = vmatpush2.msra.mxu0 0.0
    %340 = vmatprep.subr.mxu0 0.0
    %341 = vmatpush2.msra.mxu0 0.0
    %342 = vmatprep.subr.mxu0 0.0
    %343 = vmatpush2.msra.mxu0 0.0
    %344 = vmatprep.subr.mxu0 0.0
    %345 = vmatpush2.msra.mxu0 0.0
    %346 = vmatprep.subr.mxu0 0.0
    %347 = vmatpush2.msra.mxu0 0.0
    %348 = vmatprep.subr.mxu0 0.0
    %349 = vmatpush2.msra.mxu0 0.0
    %350 = vmatprep.subr.mxu0 0.0
    %351 = vmatpush2.msra.mxu0 0.0
    %352 = vmatprep.subr.mxu0 0.0
    %353 = vmatpush2.msra.mxu0 0.0
    %354 = vmatprep.subr.mxu0 0.0
    %355 = vmatpush2.msra.mxu0 0.0
    %356 = vmatprep.subr.mxu0 0.0
    %357 = vmatpush2.msra.mxu0 0.0
    %358 = vmatprep.subr.mxu0 0.0
    %359 = vmatpush2.msra.mxu0 0.0
    %360 = vmatprep.subr.mxu0 0.0
    %361 = vmatpush2.msra.mxu0 0.0
    %362 = vmatprep.subr.mxu0 0.0
    %363 = vmatpush2.msra.mxu0 0.0
    %364 = vmatprep.subr.mxu0 0.0
    %365 = vmatpush2.msra.mxu0 0.0
    %366 = vmatprep.subr.mxu0 0.0
    %367 = vmatpush2.msra.mxu0 0.0
    %368 = vmatprep.mubr.f32.mxu0 0.0
    %369 = vmatmul.mubr.f32.gmra.mxu0 %v302
    %v370 = vpop.f32.mrf.mxu0
    %v371 = vadd.f32 %v284, %v370
    %v372 = vpop.f32.mrf.mxu0
    %v373 = vadd.f32 %v288, %v372
    %374 = vdwg.mxu0
    %375 = vmatprep.subr.mxu0 0.0
    %376 = vmatpush1.msra.mxu0 0.0
    %377 = vmatprep.subr.mxu0 0.0
    %378 = vmatpush1.msra.mxu0 0.0
    %379 = vmatprep.subr.mxu0 0.0
    %380 = vmatpush1.msra.mxu0 0.0
    %381 = vmatprep.subr.mxu0 0.0
    %382 = vmatpush1.msra.mxu0 0.0
    %383 = vmatprep.subr.mxu0 0.0
    %384 = vmatpush1.msra.mxu0 0.0
    %385 = vmatprep.subr.mxu0 0.0
    %386 = vmatpush1.msra.mxu0 0.0
    %387 = vmatprep.subr.mxu0 0.0
    %388 = vmatpush1.msra.mxu0 0.0
    %389 = vmatprep.subr.mxu0 0.0
    %390 = vmatpush1.msra.mxu0 0.0
    %391 = vmatprep.subr.mxu0 %v278
    %392 = vmatpush1.msra.mxu0 %v277
    %393 = vmatprep.subr.mxu0 %v274
    %394 = vmatpush1.msra.mxu0 %v273
    %395 = vmatprep.subr.mxu0 %v270
    %396 = vmatpush1.msra.mxu0 %v269
    %397 = vmatprep.subr.mxu0 %v266
    %398 = vmatpush1.msra.mxu0 %v265
    %399 = vmatprep.subr.mxu0 %v262
    %400 = vmatpush1.msra.mxu0 %v261
    %401 = vmatprep.subr.mxu0 %v258
    %402 = vmatpush1.msra.mxu0 %v257
    %403 = vmatprep.subr.mxu0 %v254
    %404 = vmatpush1.msra.mxu0 %v253
    %405 = vmatprep.subr.mxu0 %v250
    %406 = vmatpush1.msra.mxu0 %v249
    %407 = vmatprep.subr.mxu0 0.0
    %408 = vmatpush2.msra.mxu0 0.0
    %409 = vmatprep.subr.mxu0 0.0
    %410 = vmatpush2.msra.mxu0 0.0
    %411 = vmatprep.subr.mxu0 0.0
    %412 = vmatpush2.msra.mxu0 0.0
    %413 = vmatprep.subr.mxu0 0.0
    %414 = vmatpush2.msra.mxu0 0.0
    %415 = vmatprep.subr.mxu0 0.0
    %416 = vmatpush2.msra.mxu0 0.0
    %417 = vmatprep.subr.mxu0 0.0
    %418 = vmatpush2.msra.mxu0 0.0
    %419 = vmatprep.subr.mxu0 0.0
    %420 = vmatpush2.msra.mxu0 0.0
    %421 = vmatprep.subr.mxu0 0.0
    %422 = vmatpush2.msra.mxu0 0.0
    %423 = vmatprep.subr.mxu0 0.0
    %424 = vmatpush2.msra.mxu0 0.0
    %425 = vmatprep.subr.mxu0 0.0
    %426 = vmatpush2.msra.mxu0 0.0
    %427 = vmatprep.subr.mxu0 0.0
    %428 = vmatpush2.msra.mxu0 0.0
    %429 = vmatprep.subr.mxu0 0.0
    %430 = vmatpush2.msra.mxu0 0.0
    %431 = vmatprep.subr.mxu0 0.0
    %432 = vmatpush2.msra.mxu0 0.0
    %433 = vmatprep.subr.mxu0 0.0
    %434 = vmatpush2.msra.mxu0 0.0
    %435 = vmatprep.subr.mxu0 0.0
    %436 = vmatpush2.msra.mxu0 0.0
    %437 = vmatprep.subr.mxu0 0.0
    %438 = vmatpush2.msra.mxu0 0.0
    %439 = vmatprep.mubr.f32.mxu0 0.0
    %440 = vmatmul.mubr.f32.gmra.mxu0 %v302
    %v441 = vpop.f32.mrf.mxu0
    %v442 = vadd.f32 %v292, %v441
    %v443 = vpop.f32.mrf.mxu0
    %v444 = vadd.f32 %v296, %v443
    %445 = vdwg.mxu0
    %v446 = vmax.f32 %v371, 0.0
    %v447 = vmax.f32 %v373, 0.0
    %v448 = vmax.f32 %v442, 0.0
    %v449 = vmax.f32 %v444, 0.0
    %v450 = vld [vmem:[#allocation6] sm:$0xff]
    %v451 = vld [vmem:[#allocation6 + $0x8] sm:$0xff]
    %v452 = vld [vmem:[#allocation6 + $0x10] sm:$0xff]
    %v453 = vld [vmem:[#allocation6 + $0x18] sm:$0xff]
    %v454 = vld [vmem:[#allocation6 + $0x20] sm:$0xff]
    %v455 = vld [vmem:[#allocation6 + $0x28] sm:$0xff]
    %v456 = vld [vmem:[#allocation6 + $0x30] sm:$0xff]
    %v457 = vld [vmem:[#allocation6 + $0x38] sm:$0xff]
    %v458 = vld [vmem:[#allocation6 + $0x40] sm:$0xff]
    %v459 = vld [vmem:[#allocation6 + $0x48] sm:$0xff]
    %v460 = vld [vmem:[#allocation6 + $0x50] sm:$0xff]
    %v461 = vld [vmem:[#allocation6 + $0x58] sm:$0xff]
    %v462 = vld [vmem:[#allocation6 + $0x60] sm:$0xff]
    %v463 = vld [vmem:[#allocation6 + $0x68] sm:$0xff]
    %v464 = vld [vmem:[#allocation6 + $0x70] sm:$0xff]
    %v465 = vld [vmem:[#allocation6 + $0x78] sm:$0xff]
    %v466 = vld [vmem:[#allocation6 + $0x80] sm:$0xff]
    %v467 = vld [vmem:[#allocation6 + $0x88] sm:$0xff]
    %v468 = vld [vmem:[#allocation6 + $0x90] sm:$0xff]
    %v469 = vld [vmem:[#allocation6 + $0x98] sm:$0xff]
    %v470 = vld [vmem:[#allocation6 + $0xa0] sm:$0xff]
    %v471 = vld [vmem:[#allocation6 + $0xa8] sm:$0xff]
    %v472 = vld [vmem:[#allocation6 + $0xb0] sm:$0xff]
    %v473 = vld [vmem:[#allocation6 + $0xb8] sm:$0xff]
    %v474 = vld [vmem:[#allocation6 + $0xc0] sm:$0xff]
    %v475 = vld [vmem:[#allocation6 + $0xc8] sm:$0xff]
    %v476 = vld [vmem:[#allocation6 + $0xd0] sm:$0xff]
    %v477 = vld [vmem:[#allocation6 + $0xd8] sm:$0xff]
    %v478 = vld [vmem:[#allocation6 + $0xe0] sm:$0xff]
    %v479 = vld [vmem:[#allocation6 + $0xe8] sm:$0xff]
    %v480 = vld [vmem:[#allocation6 + $0xf0] sm:$0xff]
    %v481 = vld [vmem:[#allocation6 + $0xf8] sm:$0xff]
    %v482 = vld [vmem:[#allocation6 + $0x100] sm:$0xff]
    %v483 = vld [vmem:[#allocation6 + $0x108] sm:$0xff]
    %v484 = vld [vmem:[#allocation6 + $0x110] sm:$0xff]
    %v485 = vld [vmem:[#allocation6 + $0x118] sm:$0xff]
    %v486 = vld [vmem:[#allocation6 + $0x120] sm:$0xff]
    %v487 = vld [vmem:[#allocation6 + $0x128] sm:$0xff]
    %v488 = vld [vmem:[#allocation6 + $0x130] sm:$0xff]
    %v489 = vld [vmem:[#allocation6 + $0x138] sm:$0xff]
    %v490 = vld [vmem:[#allocation6 + $0x140] sm:$0xff]
    %v491 = vld [vmem:[#allocation6 + $0x148] sm:$0xff]
    %v492 = vld [vmem:[#allocation6 + $0x150] sm:$0xff]
    %v493 = vld [vmem:[#allocation6 + $0x158] sm:$0xff]
    %v494 = vld [vmem:[#allocation6 + $0x160] sm:$0xff]
    %v495 = vld [vmem:[#allocation6 + $0x168] sm:$0xff]
    %v496 = vld [vmem:[#allocation6 + $0x170] sm:$0xff]
    %v497 = vld [vmem:[#allocation6 + $0x178] sm:$0xff]
    %v498 = vld [vmem:[#allocation6 + $0x180] sm:$0xff]
    %v499 = vld [vmem:[#allocation6 + $0x188] sm:$0xff]
    %v500 = vld [vmem:[#allocation6 + $0x190] sm:$0xff]
    %v501 = vld [vmem:[#allocation6 + $0x198] sm:$0xff]
    %v502 = vld [vmem:[#allocation6 + $0x1a0] sm:$0xff]
    %v503 = vld [vmem:[#allocation6 + $0x1a8] sm:$0xff]
    %v504 = vld [vmem:[#allocation6 + $0x1b0] sm:$0xff]
    %v505 = vld [vmem:[#allocation6 + $0x1b8] sm:$0xff]
    %v506 = vld [vmem:[#allocation6 + $0x1c0] sm:$0xff]
    %v507 = vld [vmem:[#allocation6 + $0x1c8] sm:$0xff]
    %v508 = vld [vmem:[#allocation6 + $0x1d0] sm:$0xff]
    %v509 = vld [vmem:[#allocation6 + $0x1d8] sm:$0xff]
    %v510 = vld [vmem:[#allocation6 + $0x1e0] sm:$0xff]
    %v511 = vld [vmem:[#allocation6 + $0x1e8] sm:$0xff]
    %v512 = vld [vmem:[#allocation6 + $0x1f0] sm:$0xff]
    %v513 = vld [vmem:[#allocation6 + $0x1f8] sm:$0xff]
    %v514 = vld [vmem:[%s8] sm:$0x1]
    %v516 = vlaneseq
    %v517 = vshrl.u32 %v516, 7
    %v518 = vsub.s32 0, %v517
    %v519 = vrot.slane %v514, %v518
    %521 = vmatprep.subr.mxu0 0.0
    %522 = vmatpush1.msra.mxu0 %v465
    %523 = vmatprep.subr.mxu0 0.0
    %524 = vmatpush1.msra.mxu0 %v464
    %525 = vmatprep.subr.mxu0 0.0
    %526 = vmatpush1.msra.mxu0 %v463
    %527 = vmatprep.subr.mxu0 0.0
    %528 = vmatpush1.msra.mxu0 %v462
    %529 = vmatprep.subr.mxu0 0.0
    %530 = vmatpush1.msra.mxu0 %v461
    %531 = vmatprep.subr.mxu0 0.0
    %532 = vmatpush1.msra.mxu0 %v460
    %533 = vmatprep.subr.mxu0 0.0
    %534 = vmatpush1.msra.mxu0 %v459
    %535 = vmatprep.subr.mxu0 0.0
    %536 = vmatpush1.msra.mxu0 %v458
    %537 = vmatprep.subr.mxu0 0.0
    %538 = vmatpush1.msra.mxu0 %v457
    %539 = vmatprep.subr.mxu0 0.0
    %540 = vmatpush1.msra.mxu0 %v456
    %541 = vmatprep.subr.mxu0 0.0
    %542 = vmatpush1.msra.mxu0 %v455
    %543 = vmatprep.subr.mxu0 0.0
    %544 = vmatpush1.msra.mxu0 %v454
    %545 = vmatprep.subr.mxu0 0.0
    %546 = vmatpush1.msra.mxu0 %v453
    %547 = vmatprep.subr.mxu0 0.0
    %548 = vmatpush1.msra.mxu0 %v452
    %549 = vmatprep.subr.mxu0 0.0
    %550 = vmatpush1.msra.mxu0 %v451
    %551 = vmatprep.subr.mxu0 0.0
    %552 = vmatpush1.msra.mxu0 %v450
    %553 = vmatprep.subr.mxu0 0.0
    %554 = vmatpush2.msra.mxu0 %v481
    %555 = vmatprep.subr.mxu0 0.0
    %556 = vmatpush2.msra.mxu0 %v480
    %557 = vmatprep.subr.mxu0 0.0
    %558 = vmatpush2.msra.mxu0 %v479
    %559 = vmatprep.subr.mxu0 0.0
    %560 = vmatpush2.msra.mxu0 %v478
    %561 = vmatprep.subr.mxu0 0.0
    %562 = vmatpush2.msra.mxu0 %v477
    %563 = vmatprep.subr.mxu0 0.0
    %564 = vmatpush2.msra.mxu0 %v476
    %565 = vmatprep.subr.mxu0 0.0
    %566 = vmatpush2.msra.mxu0 %v475
    %567 = vmatprep.subr.mxu0 0.0
    %568 = vmatpush2.msra.mxu0 %v474
    %569 = vmatprep.subr.mxu0 0.0
    %570 = vmatpush2.msra.mxu0 %v473
    %571 = vmatprep.subr.mxu0 0.0
    %572 = vmatpush2.msra.mxu0 %v472
    %573 = vmatprep.subr.mxu0 0.0
    %574 = vmatpush2.msra.mxu0 %v471
    %575 = vmatprep.subr.mxu0 0.0
    %576 = vmatpush2.msra.mxu0 %v470
    %577 = vmatprep.subr.mxu0 0.0
    %578 = vmatpush2.msra.mxu0 %v469
    %579 = vmatprep.subr.mxu0 0.0
    %580 = vmatpush2.msra.mxu0 %v468
    %581 = vmatprep.subr.mxu0 0.0
    %582 = vmatpush2.msra.mxu0 %v467
    %583 = vmatprep.subr.mxu0 0.0
    %584 = vmatpush2.msra.mxu0 %v466
    %585 = vmatprep.mubr.f32.mxu0 %v447
    %586 = vmatmul.mubr.f32.gmra.mxu0 %v446
    %v587 = vpop.f32.mrf.mxu0
    %v588 = vadd.f32 %v519, %v587
    %v589 = vpop.f32.mrf.mxu0
    %590 = vdwg.mxu0
    %591 = vmatprep.subr.mxu0 0.0
    %592 = vmatpush1.msra.mxu0 %v497
    %593 = vmatprep.subr.mxu0 0.0
    %594 = vmatpush1.msra.mxu0 %v496
    %595 = vmatprep.subr.mxu0 0.0
    %596 = vmatpush1.msra.mxu0 %v495
    %597 = vmatprep.subr.mxu0 0.0
    %598 = vmatpush1.msra.mxu0 %v494
    %599 = vmatprep.subr.mxu0 0.0
    %600 = vmatpush1.msra.mxu0 %v493
    %601 = vmatprep.subr.mxu0 0.0
    %602 = vmatpush1.msra.mxu0 %v492
    %603 = vmatprep.subr.mxu0 0.0
    %604 = vmatpush1.msra.mxu0 %v491
    %605 = vmatprep.subr.mxu0 0.0
    %606 = vmatpush1.msra.mxu0 %v490
    %607 = vmatprep.subr.mxu0 0.0
    %608 = vmatpush1.msra.mxu0 %v489
    %609 = vmatprep.subr.mxu0 0.0
    %610 = vmatpush1.msra.mxu0 %v488
    %611 = vmatprep.subr.mxu0 0.0
    %612 = vmatpush1.msra.mxu0 %v487
    %613 = vmatprep.subr.mxu0 0.0
    %614 = vmatpush1.msra.mxu0 %v486
    %615 = vmatprep.subr.mxu0 0.0
    %616 = vmatpush1.msra.mxu0 %v485
    %617 = vmatprep.subr.mxu0 0.0
    %618 = vmatpush1.msra.mxu0 %v484
    %619 = vmatprep.subr.mxu0 0.0
    %620 = vmatpush1.msra.mxu0 %v483
    %621 = vmatprep.subr.mxu0 0.0
    %622 = vmatpush1.msra.mxu0 %v482
    %623 = vmatprep.subr.mxu0 0.0
    %624 = vmatpush2.msra.mxu0 %v513
    %625 = vmatprep.subr.mxu0 0.0
    %626 = vmatpush2.msra.mxu0 %v512
    %627 = vmatprep.subr.mxu0 0.0
    %628 = vmatpush2.msra.mxu0 %v511
    %629 = vmatprep.subr.mxu0 0.0
    %630 = vmatpush2.msra.mxu0 %v510
    %631 = vmatprep.subr.mxu0 0.0
    %632 = vmatpush2.msra.mxu0 %v509
    %633 = vmatprep.subr.mxu0 0.0
    %634 = vmatpush2.msra.mxu0 %v508
    %635 = vmatprep.subr.mxu0 0.0
    %636 = vmatpush2.msra.mxu0 %v507
    %637 = vmatprep.subr.mxu0 0.0
    %638 = vmatpush2.msra.mxu0 %v506
    %639 = vmatprep.subr.mxu0 0.0
    %640 = vmatpush2.msra.mxu0 %v505
    %641 = vmatprep.subr.mxu0 0.0
    %642 = vmatpush2.msra.mxu0 %v504
    %643 = vmatprep.subr.mxu0 0.0
    %644 = vmatpush2.msra.mxu0 %v503
    %645 = vmatprep.subr.mxu0 0.0
    %646 = vmatpush2.msra.mxu0 %v502
    %647 = vmatprep.subr.mxu0 0.0
    %648 = vmatpush2.msra.mxu0 %v501
    %649 = vmatprep.subr.mxu0 0.0
    %650 = vmatpush2.msra.mxu0 %v500
    %651 = vmatprep.subr.mxu0 0.0
    %652 = vmatpush2.msra.mxu0 %v499
    %653 = vmatprep.subr.mxu0 0.0
    %654 = vmatpush2.msra.mxu0 %v498
    %655 = vmatprep.mubr.f32.mxu0 %v449
    %656 = vmatmul.mubr.f32.gmra.mxu0 %v448
    %v657 = vpop.f32.mrf.mxu0
    %v658 = vadd.f32 %v588, %v657
    %v659 = vpop.f32.mrf.mxu0
    %660 = vdwg.mxu0
    %661 = vst [vmem:[%s9] sm:$0xff] %v658
    // Predicated region
    $region50: #{qnetwork_dueling_forward.1} parent=1 // pred_check
      _
    $region51: #{qnetwork_dueling_forward.1} parent=1 // pred_check_branch
      %663 = sbr.rel (0) target = $region53
    $region52: #{qnetwork_dueling_forward.1} parent=1 // pred_region
      _
    $region53: #{qnetwork_dueling_forward.1} parent=1 // pred_fallthru
      _
    // Predicated region
    $region54: #{qnetwork_dueling_forward.1} parent=1 // pred_check
      _
    $region55: #{qnetwork_dueling_forward.1} parent=1 // pred_check_branch
      %665 = sbr.rel (0) target = $region57
    $region56: #{qnetwork_dueling_forward.1} parent=1 // pred_region
      _
    $region57: #{qnetwork_dueling_forward.1} parent=1 // pred_fallthru
      _
    %666 = vsyncpa [#allocation3], 1
    %667 = vsyncpa [#allocation5], 1

</llo_original>
